<compile_context>
chip_gen: v5e
topology: v5e:2x2
jax: 0.10.0
libtpu: 0.0.40
codegen_flags: <defaults>
</compile_context>

<pallas_src>
import math
import numpy as np
import jax
import jax.numpy as jnp
from jax.experimental import pallas as pl
from jax.experimental.pallas import tpu as pltpu


# ----------------------------- Pallas kernels ------------------------------ #
def _make_detect_kernel(with_raw):
    """Fused 1x1-conv + sigmoid + box-decode kernel (channel-major, pixels in lanes)."""
    def kernel(x_ref, w_ref, cst_ref, gadd_ref, *out_refs):
        if with_raw:
            raw_ref, dec_ref = out_refs
        else:
            (dec_ref,) = out_refs

        # packed per-column constants: [bias, 4*anchor, linear coeff, is_x, is_y, 0, 0, 0]
        cst = cst_ref[...]
        bias = cst[:, 0:1]
        amul4 = cst[:, 1:2]
        bsel = cst[:, 2:3]
        isx = cst[:, 3:4]
        isy = cst[:, 4:5]

        # 1x1 conv as (ncols, C) @ (C, tm) on the MXU; accumulate in f32.
        acc = jnp.dot(w_ref[...], x_ref[...],
                      preferred_element_type=jnp.float32) + bias
        if with_raw:
            raw_ref[...] = acc.astype(raw_ref.dtype)

        # Overflow-safe sigmoid: exp(-|acc|) <= 1, so d in (1, 2]; EUP exp + EUP approx
        # reciprocal + one Newton step (cheap VPU ops) -> no VPU divide, no inf*0 NaN.
        e = jnp.exp(-jnp.abs(acc))
        d = 1.0 + e
        r = pl.reciprocal(d, approx=True)
        r = r * (2.0 - d * r)
        sig = jnp.where(acc >= 0.0, r, e * r)

        # per-pixel grid term; nonzero only on the xy columns.
        gterm = isx * gadd_ref[0:1, :] + isy * gadd_ref[1:2, :]

        # (4*anchor*sig + lin)*sig + gterm  ==  xy / wh / conf depending on the column.
        dec_ref[...] = ((amul4 * sig + bsel) * sig + gterm).astype(dec_ref.dtype)

    return kernel


_DETECT_KERNEL_RAW = _make_detect_kernel(True)   # returns raw conv map + decoded boxes
_DETECT_KERNEL_Z = _make_detect_kernel(False)    # decoded boxes only (half the stores)


# ------------------------------ tiling policy ------------------------------ #
def _pixel_tile(S, bs, max_tm=512):
    """Lane-dense pixel tile: a multiple of 128, <= S, capped at max_tm (VMEM-safe on
    v7x's 32 MiB scoped limit).  Ragged tails are handled by the cdiv grid (masked edge
    block).  Halve the tile if needed so the grid has >= 2 total steps (v7x dual-TC)."""
    if S < 128:
        return S                                   # full-extent block (tiny level)
    tm = min(max_tm, (S // 128) * 128)
    while bs * math.ceil(S / tm) < 2 and tm > 128:
        tm = max(128, ((tm // 2 + 127) // 128) * 128)
    return tm


# --------------------------- host-side constants ---------------------------- #
def _host_constants(bias, anchors_l, stride, ny, nx, na, no):
    ncols = na * no
    # per-pixel grid rows with the (-0.5)*stride offset pre-folded:  shape (2, ny*nx)
    gy_idx, gx_idx = np.meshgrid(np.arange(ny, dtype=np.float32),
                                 np.arange(nx, dtype=np.float32), indexing="ij")
    gadd = np.stack([(gx_idx.reshape(-1) - 0.5) * float(stride),
                     (gy_idx.reshape(-1) - 0.5) * float(stride)], axis=0)

    # per-column constants (anchor-major column order c = a*no + o, matching the
    # module's view(bs, na, no, ny, nx) channel split), packed into one (ncols, 8) array.
    anchors_np = np.asarray(anchors_l, dtype=np.float32).reshape(na, 2)
    o_idx = np.arange(ncols) % no
    a_idx = np.arange(ncols) // no
    amul4 = np.zeros((ncols,), np.float32)
    amul4[o_idx == 2] = 4.0 * anchors_np[a_idx[o_idx == 2], 0]
    amul4[o_idx == 3] = 4.0 * anchors_np[a_idx[o_idx == 3], 1]
    bsel = np.where(o_idx < 2, 2.0 * float(stride),
                    np.where(o_idx < 4, 0.0, 1.0)).astype(np.float32)
    isx = (o_idx == 0).astype(np.float32)
    isy = (o_idx == 1).astype(np.float32)

    cst = np.zeros((ncols, 8), np.float32)
    cst[:, 0] = np.asarray(bias, np.float32).reshape(-1)
    cst[:, 1] = amul4
    cst[:, 2] = bsel
    cst[:, 3] = isx
    cst[:, 4] = isy
    return jnp.asarray(cst), jnp.asarray(gadd)


# ------------------------------ level wrapper ------------------------------ #
def detect_level(x_nchw, weight, bias, anchors_l, stride, na, no,
                 *, with_raw=True, max_tm=512):
    bs, C, ny, nx = x_nchw.shape
    ncols = na * no
    S = ny * nx
    tm = _pixel_tile(S, bs, max_tm)
    n_tiles = pl.cdiv(S, tm)

    # NCHW is already channel-major / pixel-last: free reshape, NO dtype cast here —
    # native (bf16 or f32) activations flow straight into the MXU mixed-precision dot.
    x3 = x_nchw.reshape(bs, C, S)
    w_mat = weight.reshape(ncols, C).astype(x3.dtype)
    cst, gadd = _host_constants(bias, anchors_l, stride, ny, nx, na, no)

    xbytes = np.dtype(x3.dtype).itemsize
    n_out = 2 if with_raw else 1

    dec_spec = pl.BlockSpec((None, ncols, tm), lambda b, i: (b, 0, i))
    if with_raw:
        out_shape = (jax.ShapeDtypeStruct((bs, ncols, S), x3.dtype),   # raw conv output
                     jax.ShapeDtypeStruct((bs, ncols, S), jnp.float32))  # decoded boxes
        out_specs = [pl.BlockSpec((None, ncols, tm), lambda b, i: (b, 0, i)), dec_spec]
    else:
        out_shape = jax.ShapeDtypeStruct((bs, ncols, S), jnp.float32)
        out_specs = dec_spec

    # VMEM budget: double-buffered x tile + double-buffered outputs + resident consts.
    vmem_bytes = (2 * C * tm * xbytes
                  + 2 * ncols * tm * 4 * n_out
                  + ncols * C * xbytes
                  + 2 * 2 * tm * 4
                  + ncols * 8 * 4)
    vmem_limit = int(min(max(2 * vmem_bytes + (4 << 20), 16 << 20), 100 << 20))

    cost = pl.CostEstimate(
        flops=2 * bs * ncols * C * S,
        transcendentals=bs * ncols * S,
        bytes_accessed=bs * C * S * xbytes + ncols * C * xbytes
        + n_out * bs * ncols * S * 4,
    )

    outs = pl.pallas_call(
        _DETECT_KERNEL_RAW if with_raw else _DETECT_KERNEL_Z,
        out_shape=out_shape,
        grid_spec=pltpu.PrefetchScalarGridSpec(
            num_scalar_prefetch=0,
            grid=(bs, n_tiles),
            in_specs=[
                pl.BlockSpec((None, C, tm), lambda b, i: (b, 0, i)),  # x tile (C, tm)
                pl.BlockSpec((ncols, C), lambda b, i: (0, 0)),        # weights (resident)
                pl.BlockSpec((ncols, 8), lambda b, i: (0, 0)),        # packed per-col consts
                pl.BlockSpec((2, tm), lambda b, i: (0, i)),           # grid rows
            ],
            out_specs=out_specs,
        ),
        compiler_params=pltpu.CompilerParams(
            dimension_semantics=("parallel", "parallel"),
            vmem_limit_bytes=vmem_limit),
        cost_estimate=cost,
    )(x3, w_mat, cst, gadd)

    if with_raw:
        raw, dec = outs
        # The module's own view(bs,na,no,ny,nx).permute(0,1,3,4,2); doing it here (XLA)
        # keeps the kernel's stores lane-dense.
        raw5 = raw.reshape(bs, na, no, ny, nx).transpose(0, 1, 3, 4, 2)
    else:
        raw5, dec = None, outs
    # TODO(synk): downstream NMS could consume dec's native (bs, na*no, S) layout and
    # skip this 8-wide-minor transpose; kept here to match the module's output format.
    z = dec.reshape(bs, na, no, ny, nx).transpose(0, 1, 3, 4, 2).reshape(bs, na * S, no)
    return raw5, z


def detect_forward(xs, weights, biases, anchors, strides, na, no, *, with_raw=True):
    """Inference forward: (cat(z, axis=1), [x_i permuted]) like the PyTorch module.
    with_raw=False skips the raw conv-output maps entirely (z-only fast path, roughly
    half the kernel HBM stores at small C) and returns (z, None)."""
    zs, xs_out = [], []
    for i, x in enumerate(xs):
        raw5, z = detect_level(x, weights[i], biases[i], anchors[i],
                               strides[i], na, no, with_raw=with_raw)
        xs_out.append(raw5)
        zs.append(z)
    return jnp.concatenate(zs, axis=1), (xs_out if with_raw else None)


# --------------------------- pure-JAX reference ---------------------------- #
def detect_reference(xs, weights, biases, anchors, strides, na, no):
    zs, xs_out = [], []
    for i, x in enumerate(xs):
        bs, C, ny, nx = x.shape
        w = weights[i].reshape(na * no, C)
        y = jnp.einsum('bchw,oc->bohw', x, w,
                       precision=jax.lax.Precision.HIGHEST) \
            + biases[i][None, :, None, None]
        y = y.reshape(bs, na, no, ny, nx).transpose(0, 1, 3, 4, 2)   # (bs,na,ny,nx,no)
        xs_out.append(y)
        s = jax.nn.sigmoid(y)
        gyv, gxv = jnp.meshgrid(jnp.arange(ny, dtype=jnp.float32),
                                jnp.arange(nx, dtype=jnp.float32), indexing="ij")
        grid = jnp.stack([gxv, gyv], -1)[None, None]                 # (1,1,ny,nx,2)
        xy = (s[..., 0:2] * 2.0 - 0.5 + grid) * strides[i]
        ag = jnp.asarray(anchors[i], jnp.float32).reshape(1, na, 1, 1, 2)
        wh = (s[..., 2:4] * 2.0) ** 2 * ag
        yy = jnp.concatenate([xy, wh, s[..., 4:]], -1)
        zs.append(yy.reshape(bs, -1, no))
    return jnp.concatenate(zs, 1), xs_out


# ---------------------------------- main ----------------------------------- #
if __name__ == "__main__":
    key = jax.random.PRNGKey(0)

    # module config (small, deterministic)
    nc = 3
    no = nc + 5                      # 8
    anchors_flat = ((10., 13., 16., 30., 33., 23.),
                    (30., 61., 62., 45., 59., 119.))
    nl = len(anchors_flat)
    na = len(anchors_flat[0]) // 2   # 3
    anchors = [np.asarray(a, np.float32).reshape(na, 2) for a in anchors_flat]
    ch = (8, 16)
    strides = (8.0, 16.0)
    bs = 2
    # 20x20 = 400 pixels exercises the ragged (non-128-multiple) cdiv tiling;
    # 8x8 = 64 exercises the tiny full-extent level.
    spatials = ((20, 20), (8, 8))

    # deterministic parameters (conv weight (no*na, C, 1, 1) collapsed to (no*na, C))
    keys = jax.random.split(key, 3 * nl)
    weights, biases, xs = [], [], []
    for i in range(nl):
        weights.append(0.05 * jax.random.normal(keys[2 * i], (no * na, ch[i]),
                                                dtype=jnp.float32))
        biases.append(0.1 * jax.random.normal(keys[2 * i + 1], (no * na,),
                                              dtype=jnp.float32))
        ny, nx = spatials[i]
        xs.append(jax.random.normal(keys[2 * nl + i], (bs, ch[i], ny, nx),
                                    dtype=jnp.float32))

    # Extreme logits on two conf columns of level 0: exercises the overflow-safe sigmoid
    # (the old exp(-acc) formulation produced inf * 0 = NaN for very negative logits).
    biases[0] = biases[0].at[4].set(-200.0).at[12].set(300.0)

    # full module semantics: (cat(z, 1), permuted raw conv maps)
    z_cat, x_out = detect_forward(xs, weights, biases, anchors, strides, na, no)
    z_cat = jax.block_until_ready(z_cat)
    x_out = [jax.block_until_ready(t) for t in x_out]

    # z-only fast path (raw conv maps skipped -> ~half the kernel HBM stores)
    z_fast, _ = detect_forward(xs, weights, biases, anchors, strides, na, no,
                               with_raw=False)
    z_fast = jax.block_until_ready(z_fast)

    # verify against a pure-JAX reference of the PyTorch semantics
    z_ref, x_ref = detect_reference(xs, weights, biases, anchors, strides, na, no)

    # raw conv outputs don't touch the approx reciprocal -> tight tolerance
    for a, b in zip(x_out, x_ref):
        np.testing.assert_allclose(np.asarray(a), np.asarray(b),
                                   rtol=1e-5, atol=1e-4)
    # decoded boxes: EUP approx reciprocal + 1 Newton step, error amplified by up to
    # 2*stride / 4*anchor in the decode -> slightly looser tolerance.
    np.testing.assert_allclose(np.asarray(z_cat), np.asarray(z_ref),
                               rtol=1e-4, atol=2e-3)
    np.testing.assert_allclose(np.asarray(z_fast), np.asarray(z_ref),
                               rtol=1e-4, atol=2e-3)
    assert not np.any(np.isnan(np.asarray(z_cat)))
    assert z_cat.shape == (bs, na * sum(ny * nx for ny, nx in spatials), no)
    print("KERNEL_OK")
</pallas_src>

<mosaic_0001>
module attributes {stable_mosaic.version = 11 : i64} {
  func.func @kernel(%arg0: i32, %arg1: i32, %arg2: memref<1x8x384xf32, #tpu.memory_space<vmem>>, %arg3: memref<24x8xf32, #tpu.memory_space<vmem>>, %arg4: memref<24x8xf32, #tpu.memory_space<vmem>>, %arg5: memref<2x384xf32, #tpu.memory_space<vmem>>, %arg6: memref<1x24x384xf32, #tpu.memory_space<vmem>>, %arg7: memref<1x24x384xf32, #tpu.memory_space<vmem>>) attributes {dimension_semantics = [#tpu.dimension_semantics<parallel>, #tpu.dimension_semantics<parallel>], iteration_bounds = array<i64: 2, 2>, scalar_prefetch = 0 : i64, scratch_operands = 0 : i64, tpu.core_type = #tpu.core_type<tc>, window_params = [{transform_indices = @transform_0, window_bounds = array<i64: 1, 8, 384>}, {pipeline_mode = #tpu.pipeline_mode<synchronous>, transform_indices = @transform_1, window_bounds = array<i64: 24, 8>}, {pipeline_mode = #tpu.pipeline_mode<synchronous>, transform_indices = @transform_2, window_bounds = array<i64: 24, 8>}, {transform_indices = @transform_3, window_bounds = array<i64: 2, 384>}, {transform_indices = @transform_4, window_bounds = array<i64: 1, 24, 384>}, {transform_indices = @transform_5, window_bounds = array<i64: 1, 24, 384>}]} {
    %c0 = arith.constant 0 : index
    %c0_0 = arith.constant 0 : index
    %0 = vector.load %arg4[%c0, %c0_0] : memref<24x8xf32, #tpu.memory_space<vmem>>, vector<24x8xf32>
    %1 = vector.extract_strided_slice %0 {offsets = [0, 0], sizes = [24, 1], strides = [1, 1]} : vector<24x8xf32> to vector<24x1xf32>
    %2 = vector.extract_strided_slice %0 {offsets = [0, 1], sizes = [24, 1], strides = [1, 1]} : vector<24x8xf32> to vector<24x1xf32>
    %3 = vector.extract_strided_slice %0 {offsets = [0, 2], sizes = [24, 1], strides = [1, 1]} : vector<24x8xf32> to vector<24x1xf32>
    %4 = vector.extract_strided_slice %0 {offsets = [0, 3], sizes = [24, 1], strides = [1, 1]} : vector<24x8xf32> to vector<24x1xf32>
    %5 = vector.extract_strided_slice %0 {offsets = [0, 4], sizes = [24, 1], strides = [1, 1]} : vector<24x8xf32> to vector<24x1xf32>
    %c0_1 = arith.constant 0 : index
    %c0_2 = arith.constant 0 : index
    %6 = vector.load %arg3[%c0_1, %c0_2] : memref<24x8xf32, #tpu.memory_space<vmem>>, vector<24x8xf32>
    %c0_3 = arith.constant 0 : index
    %c0_4 = arith.constant 0 : index
    %c0_5 = arith.constant 0 : index
    %7 = vector.load %arg2[%c0_3, %c0_4, %c0_5] : memref<1x8x384xf32, #tpu.memory_space<vmem>>, vector<1x8x384xf32>
    %8 = vector.shape_cast %7 : vector<1x8x384xf32> to vector<8x384xf32>
    %cst = arith.constant dense<0.000000e+00> : vector<24x384xf32>
    %9 = tpu.matmul %6, %8, %cst {dimension_numbers = #tpu.dot_dimension_numbers<[1], [0], [0], [1], [0, 0, 1, 1], [], []>} : vector<24x8xf32>, vector<8x384xf32>, vector<24x384xf32> -> vector<24x384xf32>
    %10 = vector.broadcast %1 : vector<24x1xf32> to vector<24x384xf32>
    %11 = arith.addf %9, %10 : vector<24x384xf32>
    %c0_6 = arith.constant 0 : index
    %c0_7 = arith.constant 0 : index
    %c0_8 = arith.constant 0 : index
    %12 = vector.load %arg6[%c0_6, %c0_7, %c0_8] : memref<1x24x384xf32, #tpu.memory_space<vmem>>, vector<1x24x384xf32>
    %13 = vector.shape_cast %12 : vector<1x24x384xf32> to vector<24x384xf32>
    %14 = vector.shape_cast %11 : vector<24x384xf32> to vector<1x24x384xf32>
    tpu.vector_store %arg6[%c0_6, %c0_7, %c0_8], %14 {strides = array<i32>} : memref<1x24x384xf32, #tpu.memory_space<vmem>>, vector<1x24x384xf32>,
    %15 = math.absf %11 : vector<24x384xf32>
    %cst_9 = arith.constant 0.000000e+00 : f32
    %16 = vector.broadcast %cst_9 : f32 to vector<24x384xf32>
    %17 = arith.subf %16, %15 : vector<24x384xf32>
    %18 = math.exp %17 : vector<24x384xf32>
    %cst_10 = arith.constant 1.000000e+00 : f32
    %19 = vector.broadcast %cst_10 : f32 to vector<24x384xf32>
    %20 = arith.addf %19, %18 : vector<24x384xf32>
    %21 = tpu.reciprocal %20 {approx = true} : vector<24x384xf32> -> vector<24x384xf32>
    %22 = arith.mulf %20, %21 : vector<24x384xf32>
    %cst_11 = arith.constant 2.000000e+00 : f32
    %23 = vector.broadcast %cst_11 : f32 to vector<24x384xf32>
    %24 = arith.subf %23, %22 : vector<24x384xf32>
    %25 = arith.mulf %21, %24 : vector<24x384xf32>
    %cst_12 = arith.constant 0.000000e+00 : f32
    %26 = vector.broadcast %cst_12 : f32 to vector<24x384xf32>
    %27 = arith.cmpf oge, %11, %26 : vector<24x384xf32>
    %28 = arith.mulf %18, %25 : vector<24x384xf32>
    %29 = arith.select %27, %25, %28 : vector<24x384xi1>, vector<24x384xf32>
    %c0_13 = arith.constant 0 : index
    %c0_14 = arith.constant 0 : index
    %30 = vector.load %arg5[%c0_13, %c0_14] : memref<2x384xf32, #tpu.memory_space<vmem>>, vector<1x384xf32>
    %31 = vector.broadcast %4 : vector<24x1xf32> to vector<24x384xf32>
    %32 = vector.broadcast %30 : vector<1x384xf32> to vector<24x384xf32>
    %33 = arith.mulf %31, %32 : vector<24x384xf32>
    %c1 = arith.constant 1 : index
    %c0_15 = arith.constant 0 : index
    %34 = vector.load %arg5[%c1, %c0_15] : memref<2x384xf32, #tpu.memory_space<vmem>>, vector<1x384xf32>
    %35 = vector.broadcast %5 : vector<24x1xf32> to vector<24x384xf32>
    %36 = vector.broadcast %34 : vector<1x384xf32> to vector<24x384xf32>
    %37 = arith.mulf %35, %36 : vector<24x384xf32>
    %38 = arith.addf %33, %37 : vector<24x384xf32>
    %39 = vector.broadcast %2 : vector<24x1xf32> to vector<24x384xf32>
    %40 = arith.mulf %39, %29 : vector<24x384xf32>
    %41 = vector.broadcast %3 : vector<24x1xf32> to vector<24x384xf32>
    %42 = arith.addf %40, %41 : vector<24x384xf32>
    %43 = arith.mulf %42, %29 : vector<24x384xf32>
    %44 = arith.addf %43, %38 : vector<24x384xf32>
    %c0_16 = arith.constant 0 : index
    %c0_17 = arith.constant 0 : index
    %c0_18 = arith.constant 0 : index
    %45 = vector.load %arg7[%c0_16, %c0_17, %c0_18] : memref<1x24x384xf32, #tpu.memory_space<vmem>>, vector<1x24x384xf32>
    %46 = vector.shape_cast %45 : vector<1x24x384xf32> to vector<24x384xf32>
    %47 = vector.shape_cast %44 : vector<24x384xf32> to vector<1x24x384xf32>
    tpu.vector_store %arg7[%c0_16, %c0_17, %c0_18], %47 {strides = array<i32>} : memref<1x24x384xf32, #tpu.memory_space<vmem>>, vector<1x24x384xf32>,
    return
  }
  func.func @transform_0(%arg0: i32, %arg1: i32) -> (i32, i32, i32) {
    %c0_i32 = arith.constant 0 : i32
    %c0_i32_0 = arith.constant 0 : i32
    return %arg0, %c0_i32, %arg1 : i32, i32, i32
  }
  func.func @transform_1(%arg0: i32, %arg1: i32) -> (i32, i32) {
    %c0_i32 = arith.constant 0 : i32
    %c0_i32_0 = arith.constant 0 : i32
    %c0_i32_1 = arith.constant 0 : i32
    return %c0_i32, %c0_i32_0 : i32, i32
  }
  func.func @transform_2(%arg0: i32, %arg1: i32) -> (i32, i32) {
    %c0_i32 = arith.constant 0 : i32
    %c0_i32_0 = arith.constant 0 : i32
    %c0_i32_1 = arith.constant 0 : i32
    return %c0_i32, %c0_i32_0 : i32, i32
  }
  func.func @transform_3(%arg0: i32, %arg1: i32) -> (i32, i32) {
    %c0_i32 = arith.constant 0 : i32
    %c0_i32_0 = arith.constant 0 : i32
    return %c0_i32, %arg1 : i32, i32
  }
  func.func @transform_4(%arg0: i32, %arg1: i32) -> (i32, i32, i32) {
    %c0_i32 = arith.constant 0 : i32
    %c0_i32_0 = arith.constant 0 : i32
    return %arg0, %c0_i32, %arg1 : i32, i32, i32
  }
  func.func @transform_5(%arg0: i32, %arg1: i32) -> (i32, i32, i32) {
    %c0_i32 = arith.constant 0 : i32
    %c0_i32_0 = arith.constant 0 : i32
    return %arg0, %c0_i32, %arg1 : i32, i32, i32
  }
}

</mosaic_0001>

<llo_original>
// kernel: tpu_custom_call.1
$region0: #{tpu_custom_call.1}
  #allocation0 [shape = 'u32[]', space=smem, size = 0x4, offset = 0x4, fixed_abs, tag = 'smem constant byte address 0x4 - core index']
  #allocation1 [shape = 'u32[72,128]{1,0:T(1,128)}', space=vmem, size = 0x9000, scoped, tag = 'internal scratch']
  %s0 = inlined_call_operand.hbm [shape: f32[2,8,400], index: 0, kind: input, shape index: {}]
  %s1 = inlined_call_operand.vmem [shape: f32[24,8], index: 1, kind: input, shape index: {}]
  %s2 = inlined_call_operand.vmem [shape: f32[24,8], index: 2, kind: input, shape index: {}]
  %s3 = inlined_call_operand.vmem [shape: f32[2,400], index: 3, kind: input, shape index: {}]
  %s4 = inlined_call_operand.hbm [shape: f32[2,24,400], index: 4, kind: output, shape index: {0}]
  %s5 = inlined_call_operand.hbm [shape: f32[2,24,400], index: 5, kind: output, shape index: {1}]
  %6 = xla_tuple %s4, %s5
  %s7 = sld [smem:[#allocation0]]
  $region61: #{tpu_custom_call.1} parent=0
    _
  %s9 = ssub.s32 1, %s7
  %s10 = scalar_select 0, %s9, %s7
  $region1: #{tpu_custom_call.1} parent=0
    #allocation2 [shape = 'u8[24576]{0}', space=vmem, size = 0x6000, scoped, tag = 'input window, operand 0']
    #allocation3 [shape = 's32[2]{0}', space=sflag, size = 0x8, scoped, tag = 'scoped memory for tpu_custom_call.1']
    #allocation4 [shape = 's32[2]{0}', space=sflag, size = 0x8, scoped, tag = 'scoped memory for tpu_custom_call.1']
    #allocation5 [shape = 'u8[73728]{0}', space=vmem, size = 0x12000, scoped, tag = 'output window, operand 0']
    #allocation6 [shape = 'u8[73728]{0}', space=vmem, size = 0x12000, scoped, tag = 'output window, operand 1']
    #allocation7 [shape = 's32[2]{0}', space=sflag, size = 0x8, scoped, tag = 'scoped memory for tpu_custom_call.1']
    %11 = vsyncpa [#allocation3], 0
    %s12 = scalar_lea.sflag [#allocation3], 1
    %13 = vsyncpa %s12, 0
    %14 = vsyncpa [#allocation4], 0
    %s15 = scalar_lea.sflag [#allocation4], 1
    %16 = vsyncpa %s15, 0
    %17 = vsyncpa [#allocation7], 0
    %s18 = scalar_lea.sflag [#allocation7], 1
    %19 = vsyncpa %s18, 0
    loop: start=0, step=1, limit=6
    $region2: #{tpu_custom_call.1} parent=1 // loop_pre_header
      _
    $region3: #{tpu_custom_call.1} parent=1 // loop_header
      %s21 = sphi 0, %s25
      %p22 = scmp.ge.s32.totalorder %s21, 6
      %s28 = sphi 0, %s40
      %s29 = sphi 0, %s36
      %s30 = sphi 0, %s28
      %s31 = sphi 0, %s29
      %s32 = sphi 0, %s30
      %s33 = sphi 0, %s31
      %s45 = sphi 0, %s47
      %s48 = sphi 0, %s45
      %s49 = sphi 0, %s48
      %s65 = sphi 0, %s49
      %s69 = sphi 0, %s69
      %s71 = sphi 0, %s69
      %s72 = sphi 0, %s71
      %s86 = sphi 0, %s72
      %s90 = sphi 0, %s90
      %s92 = sphi 0, %s90
      %s93 = sphi 0, %s92
      %s107 = sphi 0, %s93
      %s113 = sphi 0, %s115
      %s116 = sphi 0, %s113
      %s117 = sphi 0, %s116
      %s133 = sphi 0, %s117
      %s141 = sphi 0, %s143
      %s144 = sphi 0, %s141
      %s145 = sphi 0, %s144
      %s161 = sphi 0, %s145
      %s169 = sphi 0, %s171
      %s172 = sphi 0, %s169
      %s173 = sphi 0, %s172
      %s189 = sphi 0, %s173
    $region4: #{tpu_custom_call.1} parent=1 // loop_header_branch
      %24 = sbr.rel (%p22) target = $region8
    $region5: #{tpu_custom_call.1} parent=1 // loop_body
      %s26 = ssub.s32 %s21, 1
      %s27 = ssub.s32 %s21, 2
      %s34 = sadd.s32 1, %s29
      %p35 = scmp.ge.s32.totalorder %s34, 2
      %s36 = scalar_select %p35, 0, %s34
      %s37 = sadd.s32 1, %s28
      %s38 = scalar_select %p35, %s37, %s28
      %p39 = scmp.ge.s32.totalorder %s38, 2
      %s40 = scalar_select %p39, 0, %s38
      %s41 = ssub.s32 %s28, %s40
      %s42 = ssub.s32 %s29, %s36
      %s43 = sor.u32 %s41, %s42
      %p44 = scmp.eq.s32.totalorder %s43, 0
      %s46 = sadd.s32 %s45, 1
      %s47 = scalar_select %p44, %s45, %s46
      %p50 = pneg %p44
      %p51 = scmp.eq.s32.totalorder %s21, 3
      %p52 = por %p50, %p51
      %p53 = scmp.ne.s32.totalorder %s45, %s48
      %p54 = scmp.eq.s32.totalorder %s21, 0
      %p55 = por %p53, %p54
      %p56 = scmp.ne.s32.totalorder %s45, %s48
      %p57 = scmp.eq.s32.totalorder %s26, 3
      %p58 = por %p56, %p57
      %p59 = scmp.ne.s32.totalorder %s48, %s49
      %p60 = scmp.eq.s32.totalorder %s26, 0
      %p61 = por %p59, %p60
      %p62 = scmp.ne.s32.totalorder %s48, %s49
      %p63 = scmp.eq.s32.totalorder %s27, 3
      %p64 = por %p62, %p63
      %p66 = scmp.ne.s32.totalorder %s49, %s65
      %p67 = scmp.eq.s32.totalorder %s27, 0
      %p68 = por %p66, %p67
      %s70 = sadd.s32 %s69, 1
      %p73 = scmp.eq.s32.totalorder %s21, 3
      %p74 = scmp.ne.s32.totalorder %s69, %s71
      %p75 = scmp.eq.s32.totalorder %s21, 0
      %p76 = por %p74, %p75
      %p77 = scmp.ne.s32.totalorder %s69, %s71
      %p78 = scmp.eq.s32.totalorder %s26, 3
      %p79 = por %p77, %p78
      %p80 = scmp.ne.s32.totalorder %s71, %s72
      %p81 = scmp.eq.s32.totalorder %s26, 0
      %p82 = por %p80, %p81
      %p83 = scmp.ne.s32.totalorder %s71, %s72
      %p84 = scmp.eq.s32.totalorder %s27, 3
      %p85 = por %p83, %p84
      %p87 = scmp.ne.s32.totalorder %s72, %s86
      %p88 = scmp.eq.s32.totalorder %s27, 0
      %p89 = por %p87, %p88
      %s91 = sadd.s32 %s90, 1
      %p94 = scmp.eq.s32.totalorder %s21, 3
      %p95 = scmp.ne.s32.totalorder %s90, %s92
      %p96 = scmp.eq.s32.totalorder %s21, 0
      %p97 = por %p95, %p96
      %p98 = scmp.ne.s32.totalorder %s90, %s92
      %p99 = scmp.eq.s32.totalorder %s26, 3
      %p100 = por %p98, %p99
      %p101 = scmp.ne.s32.totalorder %s92, %s93
      %p102 = scmp.eq.s32.totalorder %s26, 0
      %p103 = por %p101, %p102
      %p104 = scmp.ne.s32.totalorder %s92, %s93
      %p105 = scmp.eq.s32.totalorder %s27, 3
      %p106 = por %p104, %p105
      %p108 = scmp.ne.s32.totalorder %s93, %s107
      %p109 = scmp.eq.s32.totalorder %s27, 0
      %p110 = por %p108, %p109
      %s111 = ssub.s32 %s29, %s36
      %p112 = scmp.eq.s32.totalorder %s111, 0
      %s114 = sadd.s32 %s113, 1
      %s115 = scalar_select %p112, %s113, %s114
      %p118 = pneg %p112
      %p119 = scmp.eq.s32.totalorder %s21, 3
      %p120 = por %p118, %p119
      %p121 = scmp.ne.s32.totalorder %s113, %s116
      %p122 = scmp.eq.s32.totalorder %s21, 0
      %p123 = por %p121, %p122
      %p124 = scmp.ne.s32.totalorder %s113, %s116
      %p125 = scmp.eq.s32.totalorder %s26, 3
      %p126 = por %p124, %p125
      %p127 = scmp.ne.s32.totalorder %s116, %s117
      %p128 = scmp.eq.s32.totalorder %s26, 0
      %p129 = por %p127, %p128
      %p130 = scmp.ne.s32.totalorder %s116, %s117
      %p131 = scmp.eq.s32.totalorder %s27, 3
      %p132 = por %p130, %p131
      %p134 = scmp.ne.s32.totalorder %s117, %s133
      %p135 = scmp.eq.s32.totalorder %s27, 0
      %p136 = por %p134, %p135
      %s137 = ssub.s32 %s28, %s40
      %s138 = ssub.s32 %s29, %s36
      %s139 = sor.u32 %s137, %s138
      %p140 = scmp.eq.s32.totalorder %s139, 0
      %s142 = sadd.s32 %s141, 1
      %s143 = scalar_select %p140, %s141, %s142
      %p146 = pneg %p140
      %p147 = scmp.eq.s32.totalorder %s21, 3
      %p148 = por %p146, %p147
      %p149 = scmp.ne.s32.totalorder %s141, %s144
      %p150 = scmp.eq.s32.totalorder %s21, 0
      %p151 = por %p149, %p150
      %p152 = scmp.ne.s32.totalorder %s141, %s144
      %p153 = scmp.eq.s32.totalorder %s26, 3
      %p154 = por %p152, %p153
      %p155 = scmp.ne.s32.totalorder %s144, %s145
      %p156 = scmp.eq.s32.totalorder %s26, 0
      %p157 = por %p155, %p156
      %p158 = scmp.ne.s32.totalorder %s144, %s145
      %p159 = scmp.eq.s32.totalorder %s27, 3
      %p160 = por %p158, %p159
      %p162 = scmp.ne.s32.totalorder %s145, %s161
      %p163 = scmp.eq.s32.totalorder %s27, 0
      %p164 = por %p162, %p163
      %s165 = ssub.s32 %s28, %s40
      %s166 = ssub.s32 %s29, %s36
      %s167 = sor.u32 %s165, %s166
      %p168 = scmp.eq.s32.totalorder %s167, 0
      %s170 = sadd.s32 %s169, 1
      %s171 = scalar_select %p168, %s169, %s170
      %p174 = pneg %p168
      %p175 = scmp.eq.s32.totalorder %s21, 3
      %p176 = por %p174, %p175
      %p177 = scmp.ne.s32.totalorder %s169, %s172
      %p178 = scmp.eq.s32.totalorder %s21, 0
      %p179 = por %p177, %p178
      %p180 = scmp.ne.s32.totalorder %s169, %s172
      %p181 = scmp.eq.s32.totalorder %s26, 3
      %p182 = por %p180, %p181
      %p183 = scmp.ne.s32.totalorder %s172, %s173
      %p184 = scmp.eq.s32.totalorder %s26, 0
      %p185 = por %p183, %p184
      %p186 = scmp.ne.s32.totalorder %s172, %s173
      %p187 = scmp.eq.s32.totalorder %s27, 3
      %p188 = por %p186, %p187
      %p190 = scmp.ne.s32.totalorder %s173, %s189
      %p191 = scmp.eq.s32.totalorder %s27, 0
      %p192 = por %p190, %p191
      %p193 = scmp.le.s32.totalorder 1, %s21
      %p194 = scmp.lt.s32.totalorder %s21, 5
      %p195 = pnand %p193, %p194
      %p196 = pneg %p195
      // Predicated region
      $region9: #{tpu_custom_call.1} parent=5 // pred_check
        _
      $region10: #{tpu_custom_call.1} parent=5 // pred_check_branch
        %198 = sbr.rel (%p195) target = $region12
      $region11: #{tpu_custom_call.1} parent=5 // pred_region
        %s199 = ssub.s32 %s21, 1
        // Predicated region
        $region13: #{tpu_custom_call.1} parent=11 // pred_check
          %p200 = pneg %p82
        $region14: #{tpu_custom_call.1} parent=11 // pred_check_branch
          %202 = sbr.rel (%p200) target = $region16
        $region15: #{tpu_custom_call.1} parent=11 // pred_region
          _
        $region16: #{tpu_custom_call.1} parent=11 // pred_fallthru
          _
        // Predicated region
        $region17: #{tpu_custom_call.1} parent=11 // pred_check
          %p203 = pneg %p103
        $region18: #{tpu_custom_call.1} parent=11 // pred_check_branch
          %205 = sbr.rel (%p203) target = $region20
        $region19: #{tpu_custom_call.1} parent=11 // pred_region
          _
        $region20: #{tpu_custom_call.1} parent=11 // pred_fallthru
          _
      $region12: #{tpu_custom_call.1} parent=5 // pred_fallthru
        _
      %p206 = scmp.lt.s32.totalorder %s21, 4
      // Predicated region
      $region21: #{tpu_custom_call.1} parent=5 // pred_check
        %p207 = pneg %p206
      $region22: #{tpu_custom_call.1} parent=5 // pred_check_branch
        %209 = sbr.rel (%p207) target = $region24
      $region23: #{tpu_custom_call.1} parent=5 // pred_region
        // Predicated region
        $region25: #{tpu_custom_call.1} parent=23 // pred_check
          %p210 = pneg %p55
        $region26: #{tpu_custom_call.1} parent=23 // pred_check_branch
          %212 = sbr.rel (%p210) target = $region28
        $region27: #{tpu_custom_call.1} parent=23 // pred_region
          %s213 = sand.u32 %s45, 1
          %s214 = scalar_lea.sflag [#allocation3], %s213
          %s215 = sand.u32 %s45, 1
          %s216 = smul.addr %s215, 24
          %s217 = scalar_lea.vmem [#allocation2], %s216
          %s218 = smul.u32 3, %s29
          %s219 = ssub.s32 4, %s218
          %p220 = scmp.lt.s32.totalorder %s219, 3
          %s221 = scalar_select %p220, %s219, 3
          %s222 = smul.u32 8, %s221
          %s223 = ssub.s32 24, %s222
          %s224 = sshll.u32 %s223, 4
          %225 = vsyncadd %s214, %s224
          %p226 = scmp.ne.s32.totalorder 0, %s222
          %s227 = smul.addr %s28, 4
          %s228 = sadd.s32 %s218, %s227
          %s229 = smul.addr %s228, 8
          %s230 = scalar_lea.hbm %s0, %s229
          %s231 = smul.u32 %s221, 8
          %s232 = sshll.u32 %s231, 4
          %s233 = sshll.u32 %s230, 4
          %s234 = int_to_ptr.hbm [resolvable:$true] %s233
          %s235 = sshll.u32 %s217, 4
          %s236 = int_to_ptr.vmem [resolvable:$true] %s235
          %238 = dma.hbm_to_vmem [thread:$0]  (%p226), %s234, %s232, %s236, %s214
        $region28: #{tpu_custom_call.1} parent=23 // pred_fallthru
          _
        // Predicated region
        $region29: #{tpu_custom_call.1} parent=23 // pred_check
          %p239 = pneg %p123
        $region30: #{tpu_custom_call.1} parent=23 // pred_check_branch
          %241 = sbr.rel (%p239) target = $region32
        $region31: #{tpu_custom_call.1} parent=23 // pred_region
          %s242 = smul.u32 3, %s29
          %s243 = ssub.s32 4, %s242
          %p244 = scmp.lt.s32.totalorder %s243, 3
          %s245 = scalar_select %p244, %s243, 3
          %s246 = smul.u32 2, %s245
          %p247 = scmp.lt.s32.totalorder %s242, 3
          %s248 = scalar_select %p247, %s242, 3
          %s249 = smul.addr %s248, 2
          %s250 = scalar_lea.vmem %s3, %s249
          %s251 = smul.u32 3, %s29
          %s252 = ssub.s32 4, %s251
          %p253 = scmp.lt.s32.totalorder %s252, 3
          %s254 = scalar_select %p253, %s252, 3
          %s255 = smul.u32 2, %s254
        $region32: #{tpu_custom_call.1} parent=23 // pred_fallthru
          _
      $region24: #{tpu_custom_call.1} parent=5 // pred_fallthru
        _
      %p256 = scmp.le.s32.totalorder 1, %s21
      %p257 = scmp.lt.s32.totalorder %s21, 5
      %p258 = pnand %p256, %p257
      %p259 = pneg %p258
      // Predicated region
      $region33: #{tpu_custom_call.1} parent=5 // pred_check
        _
      $region34: #{tpu_custom_call.1} parent=5 // pred_check_branch
        %261 = sbr.rel (%p258) target = $region36
      $region35: #{tpu_custom_call.1} parent=5 // pred_region
        %s262 = ssub.s32 %s21, 1
        %s263 = sand.u32 %s48, 1
        %s264 = scalar_lea.sflag [#allocation3], %s263
        %s265 = sand.u32 %s48, 1
        %s266 = smul.addr %s265, 24
        %s267 = scalar_lea.vmem [#allocation2], %s266
        // Predicated region
        $region37: #{tpu_custom_call.1} parent=35 // pred_check
          %p268 = pneg %p61
        $region38: #{tpu_custom_call.1} parent=35 // pred_check_branch
          %270 = sbr.rel (%p268) target = $region40
        $region39: #{tpu_custom_call.1} parent=35 // pred_region
          %272 = dma.done %s264, 384
        $region40: #{tpu_custom_call.1} parent=35 // pred_fallthru
          _
        %s273 = sand.u32 %s48, 1
        %s274 = scalar_lea.sflag [#allocation3], %s273
        %s275 = sand.u32 %s48, 1
        %s276 = smul.addr %s275, 24
        %s277 = scalar_lea.vmem [#allocation2], %s276
        %p278 = pneg %p61
        %p279 = pneg %p58
        %p280 = pneg %p82
        %p281 = pneg %p79
        %p282 = pneg %p103
        %p283 = pneg %p100
        %s284 = smul.u32 3, %s31
        %s285 = ssub.s32 4, %s284
        %p286 = scmp.lt.s32.totalorder %s285, 3
        %s287 = scalar_select %p286, %s285, 3
        %s288 = smul.u32 2, %s287
        %p289 = scmp.lt.s32.totalorder %s284, 3
        %s290 = scalar_select %p289, %s284, 3
        %s291 = smul.addr %s290, 2
        %s292 = scalar_lea.vmem %s3, %s291
        %p293 = pneg %p129
        %p294 = pneg %p126
        %p295 = pneg %p157
        %p296 = pneg %p154
        %s297 = sand.u32 %s144, 1
        %s298 = scalar_lea.sflag [#allocation4], %s297
        %s299 = sand.u32 %s144, 1
        %s300 = smul.addr %s299, 72
        %s301 = scalar_lea.vmem [#allocation5], %s300
        %p302 = pneg %p185
        %p303 = pneg %p182
        %s304 = sand.u32 %s172, 1
        %s305 = scalar_lea.sflag [#allocation7], %s304
        %s306 = sand.u32 %s172, 1
        %s307 = smul.addr %s306, 72
        %s308 = scalar_lea.vmem [#allocation6], %s307
        %s309 = smul.u32 3, %s31
        %s310 = ssub.s32 4, %s309
        %p311 = scmp.lt.s32.totalorder %s310, 3
        %s312 = scalar_select %p311, %s310, 3
        %s313 = smul.u32 8, %s312
        %s314 = smul.u32 3, %s31
        %s315 = ssub.s32 4, %s314
        %p316 = scmp.lt.s32.totalorder %s315, 3
        %s317 = scalar_select %p316, %s315, 3
        %s318 = smul.u32 2, %s317
        %p319 = scmp.lt.s32.totalorder %s314, 3
        %s320 = scalar_select %p319, %s314, 3
        %s321 = smul.addr %s320, 2
        %s322 = scalar_lea.vmem %s3, %s321
        %s323 = smul.u32 3, %s31
        %s324 = ssub.s32 4, %s323
        %p325 = scmp.lt.s32.totalorder %s324, 3
        %s326 = scalar_select %p325, %s324, 3
        %s327 = smul.u32 2, %s326
        %s328 = smul.u32 3, %s31
        %s329 = ssub.s32 4, %s328
        %p330 = scmp.lt.s32.totalorder %s329, 3
        %s331 = scalar_select %p330, %s329, 3
        %s332 = smul.u32 24, %s331
        %s333 = smul.u32 3, %s31
        %s334 = ssub.s32 4, %s333
        %p335 = scmp.lt.s32.totalorder %s334, 3
        %s336 = scalar_select %p335, %s334, 3
        %s337 = smul.u32 24, %s336
        %v338 = vld [vmem:[%s2] sm:$0xff]
        %v339 = vld [vmem:[%s2 + $0x8] sm:$0xff]
        %v340 = vld [vmem:[%s2 + $0x10] sm:$0xff]
        %v341 = vld [vmem:[%s1] sm:$0xff]
        %v342 = vld [vmem:[%s1 + $0x8] sm:$0xff]
        %v343 = vld [vmem:[%s1 + $0x10] sm:$0xff]
        %v344 = vld [vmem:[%s267] sm:$0xff]
        %v345 = vld [vmem:[%s267 + $0x8] sm:$0xff]
        %v346 = vld [vmem:[%s267 + $0x10] sm:$0xff]
        %348 = vset.pattern.permute.xlu0 0
        %349 = vperm.xlu0 %348, %v338
        %v350 = vpop.permute.xlu0 %349
        %353 = vset.pattern.permute.xlu0 0
        %354 = vperm.xlu0 %353, %v339
        %v355 = vpop.permute.xlu0 %354
        %358 = vset.pattern.permute.xlu0 0
        %359 = vperm.xlu0 %358, %v340
        %v360 = vpop.permute.xlu0 %359
        %vm362 = vcmask 64512
        %v364 = vsel %vm362, %v341, 0
        %v367 = vsel %vm362, %v342, 0
        %v370 = vsel %vm362, %v343, 0
        %372 = vmatpush.msra.mxu0 0.0
        %373 = vmatpush.msra.mxu0 0.0
        %374 = vmatpush.msra.mxu0 0.0
        %375 = vmatpush.msra.mxu0 0.0
        %376 = vmatpush.msra.mxu0 0.0
        %377 = vmatpush.msra.mxu0 0.0
        %378 = vmatpush.msra.mxu0 0.0
        %379 = vmatpush.msra.mxu0 0.0
        %380 = vmatpush.msra.mxu0 0.0
        %381 = vmatpush.msra.mxu0 0.0
        %382 = vmatpush.msra.mxu0 0.0
        %383 = vmatpush.msra.mxu0 0.0
        %384 = vmatpush.msra.mxu0 0.0
        %385 = vmatpush.msra.mxu0 0.0
        %386 = vmatpush.msra.mxu0 0.0
        %387 = vmatpush.msra.mxu0 %v344
        %388 = vmatmul.f32.gmra.mxu0 %v364
        %v389 = vpop.f32.mrf.mxu0
        %v390 = vadd.f32 %v350, %v389
        %391 = vmatmul.f32.gmra.mxu0 %v367
        %v392 = vpop.f32.mrf.mxu0
        %v393 = vadd.f32 %v355, %v392
        %394 = vmatmul.f32.gmra.mxu0 %v370
        %v395 = vpop.f32.mrf.mxu0
        %v396 = vadd.f32 %v360, %v395
        %397 = vdwg.mxu0
        %398 = vmatpush.msra.mxu0 0.0
        %399 = vmatpush.msra.mxu0 0.0
        %400 = vmatpush.msra.mxu0 0.0
        %401 = vmatpush.msra.mxu0 0.0
        %402 = vmatpush.msra.mxu0 0.0
        %403 = vmatpush.msra.mxu0 0.0
        %404 = vmatpush.msra.mxu0 0.0
        %405 = vmatpush.msra.mxu0 0.0
        %406 = vmatpush.msra.mxu0 0.0
        %407 = vmatpush.msra.mxu0 0.0
        %408 = vmatpush.msra.mxu0 0.0
        %409 = vmatpush.msra.mxu0 0.0
        %410 = vmatpush.msra.mxu0 0.0
        %411 = vmatpush.msra.mxu0 0.0
        %412 = vmatpush.msra.mxu0 0.0
        %413 = vmatpush.msra.mxu0 %v345
        %414 = vmatmul.f32.gmra.mxu0 %v364
        %v415 = vpop.f32.mrf.mxu0
        %v416 = vadd.f32 %v350, %v415
        %417 = vmatmul.f32.gmra.mxu0 %v367
        %v418 = vpop.f32.mrf.mxu0
        %v419 = vadd.f32 %v355, %v418
        %420 = vmatmul.f32.gmra.mxu0 %v370
        %v421 = vpop.f32.mrf.mxu0
        %v422 = vadd.f32 %v360, %v421
        %423 = vdwg.mxu0
        %424 = vmatpush.msra.mxu0 0.0
        %425 = vmatpush.msra.mxu0 0.0
        %426 = vmatpush.msra.mxu0 0.0
        %427 = vmatpush.msra.mxu0 0.0
        %428 = vmatpush.msra.mxu0 0.0
        %429 = vmatpush.msra.mxu0 0.0
        %430 = vmatpush.msra.mxu0 0.0
        %431 = vmatpush.msra.mxu0 0.0
        %432 = vmatpush.msra.mxu0 0.0
        %433 = vmatpush.msra.mxu0 0.0
        %434 = vmatpush.msra.mxu0 0.0
        %435 = vmatpush.msra.mxu0 0.0
        %436 = vmatpush.msra.mxu0 0.0
        %437 = vmatpush.msra.mxu0 0.0
        %438 = vmatpush.msra.mxu0 0.0
        %439 = vmatpush.msra.mxu0 %v346
        %440 = vmatmul.f32.gmra.mxu0 %v364
        %v441 = vpop.f32.mrf.mxu0
        %v442 = vadd.f32 %v350, %v441
        %443 = vmatmul.f32.gmra.mxu0 %v367
        %v444 = vpop.f32.mrf.mxu0
        %v445 = vadd.f32 %v355, %v444
        %446 = vmatmul.f32.gmra.mxu0 %v370
        %v447 = vpop.f32.mrf.mxu0
        %v448 = vadd.f32 %v360, %v447
        %449 = vdwg.mxu0
        %450 = vst [vmem:[%s301] sm:$0xff] %v390
        %451 = vst [vmem:[%s301 + $0x8] sm:$0xff] %v416
        %452 = vst [vmem:[%s301 + $0x10] sm:$0xff] %v442
        %453 = vst [vmem:[%s301 + $0x18] sm:$0xff] %v393
        %454 = vst [vmem:[%s301 + $0x20] sm:$0xff] %v419
        %455 = vst [vmem:[%s301 + $0x28] sm:$0xff] %v445
        %456 = vst [vmem:[%s301 + $0x30] sm:$0xff] %v396
        %457 = vst [vmem:[%s301 + $0x38] sm:$0xff] %v422
        %458 = vst [vmem:[%s301 + $0x40] sm:$0xff] %v448
        %v459 = vand.u32 2147483647, %v390
        %v460 = vand.u32 2147483647, %v416
        %v461 = vand.u32 2147483647, %v442
        %v462 = vand.u32 2147483647, %v393
        %v463 = vand.u32 2147483647, %v419
        %v464 = vand.u32 2147483647, %v445
        %v465 = vand.u32 2147483647, %v396
        %v466 = vand.u32 2147483647, %v422
        %v467 = vand.u32 2147483647, %v448
        %v468 = vsub.f32 0.0, %v459
        %v469 = vsub.f32 0.0, %v460
        %v470 = vsub.f32 0.0, %v461
        %v471 = vsub.f32 0.0, %v462
        %v472 = vsub.f32 0.0, %v463
        %v473 = vsub.f32 0.0, %v464
        %v474 = vsub.f32 0.0, %v465
        %v475 = vsub.f32 0.0, %v466
        %v476 = vsub.f32 0.0, %v467
        %v477 = vmul.f32 %v468, 1.442695
        %v478 = vpow.pop %v477
        %v479 = vmul.f32 %v469, 1.442695
        %v480 = vpow.pop %v479
        %v481 = vmul.f32 %v470, 1.442695
        %v482 = vpow.pop %v481
        %v483 = vmul.f32 %v471, 1.442695
        %v484 = vpow.pop %v483
        %v485 = vmul.f32 %v472, 1.442695
        %v486 = vpow.pop %v485
        %v487 = vmul.f32 %v473, 1.442695
        %v488 = vpow.pop %v487
        %v489 = vmul.f32 %v474, 1.442695
        %v490 = vpow.pop %v489
        %v491 = vmul.f32 %v475, 1.442695
        %v492 = vpow.pop %v491
        %v493 = vmul.f32 %v476, 1.442695
        %v494 = vpow.pop %v493
        %v495 = vadd.f32 %v478, 1.0
        %v496 = vadd.f32 %v480, 1.0
        %v497 = vadd.f32 %v482, 1.0
        %v498 = vadd.f32 %v484, 1.0
        %v499 = vadd.f32 %v486, 1.0
        %v500 = vadd.f32 %v488, 1.0
        %v501 = vadd.f32 %v490, 1.0
        %v502 = vadd.f32 %v492, 1.0
        %v503 = vadd.f32 %v494, 1.0
        %v504 = vrcp.pop %v495
        %v505 = vrcp.pop %v496
        %v506 = vrcp.pop %v497
        %v507 = vrcp.pop %v498
        %v508 = vrcp.pop %v499
        %v509 = vrcp.pop %v500
        %v510 = vrcp.pop %v501
        %v511 = vrcp.pop %v502
        %v512 = vrcp.pop %v503
        %v513 = vmul.f32 %v495, %v504
        %v514 = vmul.f32 %v496, %v505
        %v515 = vmul.f32 %v497, %v506
        %v516 = vmul.f32 %v498, %v507
        %v517 = vmul.f32 %v499, %v508
        %v518 = vmul.f32 %v500, %v509
        %v519 = vmul.f32 %v501, %v510
        %v520 = vmul.f32 %v502, %v511
        %v521 = vmul.f32 %v503, %v512
        %v522 = vsub.f32 2.0, %v513
        %v523 = vsub.f32 2.0, %v514
        %v524 = vsub.f32 2.0, %v515
        %v525 = vsub.f32 2.0, %v516
        %v526 = vsub.f32 2.0, %v517
        %v527 = vsub.f32 2.0, %v518
        %v528 = vsub.f32 2.0, %v519
        %v529 = vsub.f32 2.0, %v520
        %v530 = vsub.f32 2.0, %v521
        %v531 = vmul.f32 %v504, %v522
        %v532 = vmul.f32 %v505, %v523
        %v533 = vmul.f32 %v506, %v524
        %v534 = vmul.f32 %v507, %v525
        %v535 = vmul.f32 %v508, %v526
        %v536 = vmul.f32 %v509, %v527
        %v537 = vmul.f32 %v510, %v528
        %v538 = vmul.f32 %v511, %v529
        %v539 = vmul.f32 %v512, %v530
        %vm540 = vcmp.ge.f32.partialorder %v390, 0.0
        %vm541 = vcmp.ge.f32.partialorder %v416, 0.0
        %vm542 = vcmp.ge.f32.partialorder %v442, 0.0
        %vm543 = vcmp.ge.f32.partialorder %v393, 0.0
        %vm544 = vcmp.ge.f32.partialorder %v419, 0.0
        %vm545 = vcmp.ge.f32.partialorder %v445, 0.0
        %vm546 = vcmp.ge.f32.partialorder %v396, 0.0
        %vm547 = vcmp.ge.f32.partialorder %v422, 0.0
        %vm548 = vcmp.ge.f32.partialorder %v448, 0.0
        %v549 = vmul.f32 %v478, %v531
        %v550 = vmul.f32 %v480, %v532
        %v551 = vmul.f32 %v482, %v533
        %v552 = vmul.f32 %v484, %v534
        %v553 = vmul.f32 %v486, %v535
        %v554 = vmul.f32 %v488, %v536
        %v555 = vmul.f32 %v490, %v537
        %v556 = vmul.f32 %v492, %v538
        %v557 = vmul.f32 %v494, %v539
        %v558 = vsel %vm540, %v531, %v549
        %v559 = vsel %vm541, %v532, %v550
        %v560 = vsel %vm542, %v533, %v551
        %v561 = vsel %vm543, %v534, %v552
        %v562 = vsel %vm544, %v535, %v553
        %v563 = vsel %vm545, %v536, %v554
        %v564 = vsel %vm546, %v537, %v555
        %v565 = vsel %vm547, %v538, %v556
        %v566 = vsel %vm548, %v539, %v557
        %v567 = vld [vmem:[%s322] ss:$2 sm:$0x7]
        %568 = vset.pattern.permute.xlu0 3
        %569 = vperm.xlu0 %568, %v338
        %v570 = vpop.permute.xlu0 %569
        %572 = vset.pattern.permute.xlu0 3
        %573 = vperm.xlu0 %572, %v339
        %v574 = vpop.permute.xlu0 %573
        %576 = vset.pattern.permute.xlu0 3
        %577 = vperm.xlu0 %576, %v340
        %v578 = vpop.permute.xlu0 %577
        %v581 = vperm.slane %v567, 0
        %v582 = vperm.slane %v567, 1
        %v583 = vperm.slane %v567, 2
        %v587 = vmul.f32 %v570, %v581
        %v588 = vmul.f32 %v570, %v582
        %v589 = vmul.f32 %v570, %v583
        %v590 = vmul.f32 %v574, %v581
        %v591 = vmul.f32 %v574, %v582
        %v592 = vmul.f32 %v574, %v583
        %v593 = vmul.f32 %v578, %v581
        %v594 = vmul.f32 %v578, %v582
        %v595 = vmul.f32 %v578, %v583
        %s596 = scalar_lea.vmem %s322, 1
        %v597 = vld [vmem:[%s596] ss:$2 sm:$0x7]
        %598 = vset.pattern.permute.xlu0 4
        %599 = vperm.xlu0 %598, %v338
        %v600 = vpop.permute.xlu0 %599
        %602 = vset.pattern.permute.xlu0 4
        %603 = vperm.xlu0 %602, %v339
        %v604 = vpop.permute.xlu0 %603
        %606 = vset.pattern.permute.xlu0 4
        %607 = vperm.xlu0 %606, %v340
        %v608 = vpop.permute.xlu0 %607
        %v611 = vperm.slane %v597, 0
        %v612 = vperm.slane %v597, 1
        %v613 = vperm.slane %v597, 2
        %v617 = vmul.f32 %v600, %v611
        %v618 = vmul.f32 %v600, %v612
        %v619 = vmul.f32 %v600, %v613
        %v620 = vmul.f32 %v604, %v611
        %v621 = vmul.f32 %v604, %v612
        %v622 = vmul.f32 %v604, %v613
        %v623 = vmul.f32 %v608, %v611
        %v624 = vmul.f32 %v608, %v612
        %v625 = vmul.f32 %v608, %v613
        %v626 = vadd.f32 %v587, %v617
        %v627 = vadd.f32 %v588, %v618
        %v628 = vadd.f32 %v589, %v619
        %v629 = vadd.f32 %v590, %v620
        %v630 = vadd.f32 %v591, %v621
        %v631 = vadd.f32 %v592, %v622
        %v632 = vadd.f32 %v593, %v623
        %v633 = vadd.f32 %v594, %v624
        %v634 = vadd.f32 %v595, %v625
        %635 = vset.pattern.permute.xlu0 1
        %636 = vperm.xlu0 %635, %v338
        %v637 = vpop.permute.xlu0 %636
        %639 = vset.pattern.permute.xlu0 1
        %640 = vperm.xlu0 %639, %v339
        %v641 = vpop.permute.xlu0 %640
        %643 = vset.pattern.permute.xlu0 1
        %644 = vperm.xlu0 %643, %v340
        %v645 = vpop.permute.xlu0 %644
        %v647 = vmul.f32 %v637, %v558
        %v648 = vmul.f32 %v637, %v559
        %v649 = vmul.f32 %v637, %v560
        %v650 = vmul.f32 %v641, %v561
        %v651 = vmul.f32 %v641, %v562
        %v652 = vmul.f32 %v641, %v563
        %v653 = vmul.f32 %v645, %v564
        %v654 = vmul.f32 %v645, %v565
        %v655 = vmul.f32 %v645, %v566
        %656 = vset.pattern.permute.xlu0 2
        %657 = vperm.xlu0 %656, %v338
        %v658 = vpop.permute.xlu0 %657
        %660 = vset.pattern.permute.xlu0 2
        %661 = vperm.xlu0 %660, %v339
        %v662 = vpop.permute.xlu0 %661
        %664 = vset.pattern.permute.xlu0 2
        %665 = vperm.xlu0 %664, %v340
        %v666 = vpop.permute.xlu0 %665
        %v668 = vadd.f32 %v647, %v658
        %v669 = vadd.f32 %v648, %v658
        %v670 = vadd.f32 %v649, %v658
        %v671 = vadd.f32 %v650, %v662
        %v672 = vadd.f32 %v651, %v662
        %v673 = vadd.f32 %v652, %v662
        %v674 = vadd.f32 %v653, %v666
        %v675 = vadd.f32 %v654, %v666
        %v676 = vadd.f32 %v655, %v666
        %v677 = vmul.f32 %v668, %v558
        %v678 = vmul.f32 %v669, %v559
        %v679 = vmul.f32 %v670, %v560
        %v680 = vmul.f32 %v671, %v561
        %v681 = vmul.f32 %v672, %v562
        %v682 = vmul.f32 %v673, %v563
        %v683 = vmul.f32 %v674, %v564
        %v684 = vmul.f32 %v675, %v565
        %v685 = vmul.f32 %v676, %v566
        %v686 = vadd.f32 %v677, %v626
        %v687 = vadd.f32 %v678, %v627
        %v688 = vadd.f32 %v679, %v628
        %v689 = vadd.f32 %v680, %v629
        %v690 = vadd.f32 %v681, %v630
        %v691 = vadd.f32 %v682, %v631
        %v692 = vadd.f32 %v683, %v632
        %v693 = vadd.f32 %v684, %v633
        %v694 = vadd.f32 %v685, %v634
        %695 = vst [vmem:[%s308] sm:$0xff] %v686
        %696 = vst [vmem:[%s308 + $0x8] sm:$0xff] %v687
        %697 = vst [vmem:[%s308 + $0x10] sm:$0xff] %v688
        %698 = vst [vmem:[%s308 + $0x18] sm:$0xff] %v689
        %699 = vst [vmem:[%s308 + $0x20] sm:$0xff] %v690
        %700 = vst [vmem:[%s308 + $0x28] sm:$0xff] %v691
        %701 = vst [vmem:[%s308 + $0x30] sm:$0xff] %v692
        %702 = vst [vmem:[%s308 + $0x38] sm:$0xff] %v693
        %703 = vst [vmem:[%s308 + $0x40] sm:$0xff] %v694
        %s704 = sand.u32 %s144, 1
        %s705 = scalar_lea.sflag [#allocation4], %s704
        %s706 = sand.u32 %s144, 1
        %s707 = smul.addr %s706, 72
        %s708 = scalar_lea.vmem [#allocation5], %s707
        %s709 = sand.u32 %s172, 1
        %s710 = scalar_lea.sflag [#allocation7], %s709
        %s711 = sand.u32 %s172, 1
        %s712 = smul.addr %s711, 72
        %s713 = scalar_lea.vmem [#allocation6], %s712
        // Predicated region
        $region41: #{tpu_custom_call.1} parent=35 // pred_check
          %p714 = pneg %p154
        $region42: #{tpu_custom_call.1} parent=35 // pred_check_branch
          %716 = sbr.rel (%p714) target = $region44
        $region43: #{tpu_custom_call.1} parent=35 // pred_region
          %s717 = smul.u32 3, %s31
          %s718 = ssub.s32 4, %s717
          %p719 = scmp.lt.s32.totalorder %s718, 3
          %s720 = scalar_select %p719, %s718, 3
          %s721 = smul.u32 24, %s720
          %s722 = ssub.s32 72, %s721
          %s723 = sshll.u32 %s722, 4
          %724 = vsyncadd %s705, %s723
          %p725 = scmp.ne.s32.totalorder 0, %s721
          %s726 = smul.addr %s30, 12
          %s727 = sadd.s32 %s717, %s726
          %s728 = smul.addr %s727, 8
          %s729 = scalar_lea.hbm %s4, %s728
          %s730 = smul.u32 %s720, 8
          %s731 = smul.u32 %s730, 3
          %s732 = sshll.u32 %s708, 4
          %s733 = int_to_ptr.vmem [resolvable:$true] %s732
          %s734 = sshll.u32 %s729, 4
          %s735 = int_to_ptr.hbm [resolvable:$true] %s734
          %s736 = sshll.u32 %s731, 4
          %740 = dma.vmem_to_hbm [thread:$0]  (%p725), %s733, %s736, %s735, %s705, 384, 512, %s730
        $region44: #{tpu_custom_call.1} parent=35 // pred_fallthru
          _
        // Predicated region
        $region45: #{tpu_custom_call.1} parent=35 // pred_check
          %p741 = pneg %p182
        $region46: #{tpu_custom_call.1} parent=35 // pred_check_branch
          %743 = sbr.rel (%p741) target = $region48
        $region47: #{tpu_custom_call.1} parent=35 // pred_region
          %s744 = smul.u32 3, %s31
          %s745 = ssub.s32 4, %s744
          %p746 = scmp.lt.s32.totalorder %s745, 3
          %s747 = scalar_select %p746, %s745, 3
          %s748 = smul.u32 24, %s747
          %s749 = ssub.s32 72, %s748
          %s750 = sshll.u32 %s749, 4
          %751 = vsyncadd %s710, %s750
          %p752 = scmp.ne.s32.totalorder 0, %s748
          %s753 = smul.addr %s30, 12
          %s754 = sadd.s32 %s744, %s753
          %s755 = smul.addr %s754, 8
          %s756 = scalar_lea.hbm %s5, %s755
          %s757 = smul.u32 %s747, 8
          %s758 = smul.u32 %s757, 3
          %s759 = sshll.u32 %s713, 4
          %s760 = int_to_ptr.vmem [resolvable:$true] %s759
          %s761 = sshll.u32 %s756, 4
          %s762 = int_to_ptr.hbm [resolvable:$true] %s761
          %s763 = sshll.u32 %s758, 4
          %767 = dma.vmem_to_hbm [thread:$0]  (%p752), %s760, %s763, %s762, %s710, 384, 512, %s757
        $region48: #{tpu_custom_call.1} parent=35 // pred_fallthru
          _
      $region36: #{tpu_custom_call.1} parent=5 // pred_fallthru
        _
      %p768 = scmp.le.s32.totalorder 2, %s21
      // Predicated region
      $region49: #{tpu_custom_call.1} parent=5 // pred_check
        %p769 = pneg %p768
      $region50: #{tpu_custom_call.1} parent=5 // pred_check_branch
        %771 = sbr.rel (%p769) target = $region52
      $region51: #{tpu_custom_call.1} parent=5 // pred_region
        %s772 = ssub.s32 %s21, 2
        // Predicated region
        $region53: #{tpu_custom_call.1} parent=51 // pred_check
          %p773 = pneg %p160
        $region54: #{tpu_custom_call.1} parent=51 // pred_check_branch
          %775 = sbr.rel (%p773) target = $region56
        $region55: #{tpu_custom_call.1} parent=51 // pred_region
          %s776 = sand.u32 %s145, 1
          %s777 = scalar_lea.sflag [#allocation4], %s776
          %s778 = sand.u32 %s145, 1
          %s779 = smul.addr %s778, 72
          %s780 = scalar_lea.vmem [#allocation5], %s779
          %782 = dma.done %s777, 1152
        $region56: #{tpu_custom_call.1} parent=51 // pred_fallthru
          _
        // Predicated region
        $region57: #{tpu_custom_call.1} parent=51 // pred_check
          %p783 = pneg %p188
        $region58: #{tpu_custom_call.1} parent=51 // pred_check_branch
          %785 = sbr.rel (%p783) target = $region60
        $region59: #{tpu_custom_call.1} parent=51 // pred_region
          %s786 = sand.u32 %s173, 1
          %s787 = scalar_lea.sflag [#allocation7], %s786
          %s788 = sand.u32 %s173, 1
          %s789 = smul.addr %s788, 72
          %s790 = scalar_lea.vmem [#allocation6], %s789
          %792 = dma.done %s787, 1152
        $region60: #{tpu_custom_call.1} parent=51 // pred_fallthru
          _
      $region52: #{tpu_custom_call.1} parent=5 // pred_fallthru
        _
    $region6: #{tpu_custom_call.1} parent=1 // loop_footer
      %s25 = sadd.s32 1, %s21
    $region7: #{tpu_custom_call.1} parent=1 // loop_footer_branch
      %20 = sbr.rel target = $region3
    $region8: #{tpu_custom_call.1} parent=1 // loop_exit
      _
    %793 = vsyncpa [#allocation3], 1
    %s794 = scalar_lea.sflag [#allocation3], 1
    %795 = vsyncpa %s794, 1
    %796 = vsyncpa [#allocation4], 1
    %s797 = scalar_lea.sflag [#allocation4], 1
    %798 = vsyncpa %s797, 1
    %799 = vsyncpa [#allocation7], 1
    %s800 = scalar_lea.sflag [#allocation7], 1
    %801 = vsyncpa %s800, 1

</llo_original>
